<compile_context>
chip_gen: v5e
topology: v5e:2x2
jax: 0.10.0
libtpu: 0.0.40
codegen_flags: <defaults>
</compile_context>

<pallas_src>
import jax
import jax.numpy as jnp
from jax import lax
from jax.experimental import pallas as pl
from jax.experimental.pallas import tpu as pltpu


def _upsample_conv_kernel(x_ref, u_ref, w_ref, b_ref, out_ref, xu_ref):
    # x_ref:   (nb, C, L)    batch block of the input (C % 8 == 0)
    # u_ref:   (L, 2L)       0/1 nearest-upsample / interleave matrix
    # w_ref:   (3C, C)       stacked conv taps [w0; w1; w2]
    # b_ref:   (C, 1)        conv bias
    # out_ref: (nb, C, 2L)   final interleaved output block
    # xu_ref:  (nb, C, 2L)   VMEM scratch holding the upsampled block
    nb, C, L = x_ref.shape
    L2 = 2 * L

    u = u_ref[...]
    w = w_ref[...]

    # Hoisted loop invariants (JAX does not CSE broadcast_in_dim / iota).
    b_full = jnp.broadcast_to(b_ref[...], (C, L2))
    col = lax.broadcasted_iota(jnp.int32, (C, L2), 1)
    not_first = col != 0          # zero-pad left conv boundary
    not_last = col != (L2 - 1)    # zero-pad right conv boundary

    # One fused MXU matmul upsamples (and lane-interleaves) the whole batch
    # block: (nb*C, L) @ (L, 2L) -> (nb*C, 2L).  Reshapes are layout no-ops
    # because C % 8 == 0.
    x2d = x_ref[...].reshape(nb * C, L)
    xu_ref[...] = jnp.dot(
        x2d, u, preferred_element_type=jnp.float32
    ).reshape(nb, C, L2)

    def body(bi, carry):
        # Stacked-tap conv matmul on the upsampled slab: (3C, C) @ (C, 2L).
        r = jnp.dot(w, xu_ref[bi], preferred_element_type=jnp.float32)
        r0 = r[0 * C:1 * C]     # w0 @ xu      (sublane-aligned slices)
        r1 = r[1 * C:2 * C]     # w1 @ xu
        r2 = r[2 * C:3 * C]     # w2 @ xu
        # out[:, j] = r0[:, j-1] + r1[:, j] + r2[:, j+1] + b  (zero-padded).
        prev = jnp.where(not_first, pltpu.roll(r0, shift=1, axis=1), 0.0)
        nxt = jnp.where(not_last, pltpu.roll(r2, shift=L2 - 1, axis=1), 0.0)
        out_ref[bi] = (prev + r1 + nxt + b_full).astype(out_ref.dtype)
        return carry

    lax.fori_loop(0, nb, body, 0)


def _pick_batch_block(N, C, L, budget_bytes=24 * 1024 * 1024):
    """Largest divisor of N whose per-step footprint fits the VMEM budget,
    while keeping the grid >= 2 steps (v7x has 2 TensorCores)."""
    # Bytes that scale with nb: double-buffered input (C*L) and output (2C*L)
    # blocks plus the single-buffered upsample scratch (2C*L).
    per_elem = 4 * (2 * (C * L + 2 * C * L) + 2 * C * L)      # = 32*C*L bytes
    # Block-invariant residents: U, stacked weights, loop temporaries.
    resident = 4 * (2 * L * L + 3 * C * C + 10 * C * L)
    cap = max(1, (budget_bytes - resident) // max(per_elem, 1))
    cap = min(cap, N)
    if N >= 2:
        cap = min(cap, max(1, N // 2))   # keep >= 2 grid steps when possible
    nb = 1
    for d in range(1, int(cap) + 1):
        if N % d == 0:
            nb = d
    return nb


def upsample_forward(x, weight, bias, with_conv=True):
    """x: (N, C, L) f32; weight: (C, C, 3) PyTorch Conv1d layout; bias: (C,)."""
    N, C, L = x.shape
    if not with_conv:
        # No-conv branch: pure nearest upsample (layout glue only).
        return jnp.repeat(x, 2, axis=-1)

    x = x.astype(jnp.float32)
    w = weight.astype(jnp.float32)
    b = bias.astype(jnp.float32)

    # Pad channels to a multiple of 8 (f32 sublane) so in-kernel reshapes and
    # tap slices stay tile-aligned.  Production channel counts already are;
    # this only triggers for odd test shapes.
    Cp = -(-C // 8) * 8
    if Cp != C:
        pc = Cp - C
        x = jnp.pad(x, ((0, 0), (0, pc), (0, 0)))
        w = jnp.pad(w, ((0, pc), (0, pc), (0, 0)))
        b = jnp.pad(b, ((0, pc),))

    # Hoisted weight preprocessing: stacked taps [w0; w1; w2] -> (3Cp, Cp).
    w_stack = jnp.concatenate([w[:, :, 0], w[:, :, 1], w[:, :, 2]], axis=0)
    b2 = b.reshape(Cp, 1)

    # Nearest-upsample-by-2 as a 0/1 interleaving matrix: xu = x @ U.
    tt = jnp.arange(L, dtype=jnp.int32)[:, None]
    jj = jnp.arange(2 * L, dtype=jnp.int32)[None, :]
    u_mat = (jj // 2 == tt).astype(jnp.float32)               # (L, 2L)

    nb = _pick_batch_block(N, Cp, L)
    L2 = 2 * L

    y = pl.pallas_call(
        _upsample_conv_kernel,
        out_shape=jax.ShapeDtypeStruct((N, Cp, L2), jnp.float32),
        grid_spec=pltpu.PrefetchScalarGridSpec(
            num_scalar_prefetch=0,
            grid=(N // nb,),
            in_specs=[
                pl.BlockSpec((nb, Cp, L), lambda i: (i, 0, 0)),
                pl.BlockSpec((L, L2), lambda i: (0, 0)),      # resident U
                pl.BlockSpec((3 * Cp, Cp), lambda i: (0, 0)),  # resident weights
                pl.BlockSpec((Cp, 1), lambda i: (0, 0)),       # resident bias
            ],
            out_specs=pl.BlockSpec((nb, Cp, L2), lambda i: (i, 0, 0)),
            scratch_shapes=[pltpu.VMEM((nb, Cp, L2), jnp.float32)],
        ),
        compiler_params=pltpu.CompilerParams(
            dimension_semantics=("parallel",),
            vmem_limit_bytes=32 * 1024 * 1024,
        ),
    )(x, u_mat, w_stack, b2)

    if Cp != C:
        y = y[:, :C, :]
    return y


def _reference_forward(x, weight, bias):
    """Pure-JAX reference: nearest upsample x2 + Conv1d(k=3, pad=1)."""
    xu = jnp.repeat(x, 2, axis=-1)  # (N, C, 2L)
    out = lax.conv_general_dilated(
        xu, weight,
        window_strides=(1,),
        padding=[(1, 1)],
        dimension_numbers=("NCW", "OIW", "NCW"),
        precision=lax.Precision.HIGHEST,
    )
    return out + bias.reshape(1, -1, 1)


if __name__ == "__main__":
    key = jax.random.PRNGKey(0)
    # Two small shapes: one exercising the channel-padding path (C=4 -> 8),
    # one exercising nb > 1 batch blocking with aligned channels.
    for (N, C, L) in [(2, 4, 16), (4, 8, 32)]:
        k_x, k_w, k_b, key = jax.random.split(key, 4)
        x = jax.random.normal(k_x, (N, C, L), dtype=jnp.float32)
        # Deterministic synthetic Conv1d parameters (nn.Conv1d(C, C, 3) shapes).
        weight = 0.1 * jax.random.normal(k_w, (C, C, 3), dtype=jnp.float32)
        bias = 0.1 * jax.random.normal(k_b, (C,), dtype=jnp.float32)

        out = jax.block_until_ready(upsample_forward(x, weight, bias, with_conv=True))
        ref = jax.block_until_ready(_reference_forward(x, weight, bias))

        assert out.shape == (N, C, 2 * L), out.shape
        # Tolerance covers the MXU's default f32 (multi-pass bf16) matmul path.
        max_err = float(jnp.max(jnp.abs(out - ref)))
        assert jnp.allclose(out, ref, atol=5e-3, rtol=5e-3), max_err

    print("KERNEL_OK")
</pallas_src>

<mosaic_0001>
module attributes {stable_mosaic.version = 11 : i64} {
  func.func @_upsample_conv_kernel(%arg0: i32, %arg1: memref<1x8x16xf32, #tpu.memory_space<vmem>>, %arg2: memref<16x32xf32, #tpu.memory_space<vmem>>, %arg3: memref<24x8xf32, #tpu.memory_space<vmem>>, %arg4: memref<8x1xf32, #tpu.memory_space<vmem>>, %arg5: memref<1x8x32xf32, #tpu.memory_space<vmem>>, %arg6: memref<1x8x32xf32, #tpu.memory_space<vmem>>) attributes {dimension_semantics = [#tpu.dimension_semantics<parallel>], iteration_bounds = array<i64: 2>, scalar_prefetch = 0 : i64, scratch_operands = 1 : i64, tpu.core_type = #tpu.core_type<tc>, window_params = [{transform_indices = @transform_0, window_bounds = array<i64: 1, 8, 16>}, {pipeline_mode = #tpu.pipeline_mode<synchronous>, transform_indices = @transform_1, window_bounds = array<i64: 16, 32>}, {pipeline_mode = #tpu.pipeline_mode<synchronous>, transform_indices = @transform_2, window_bounds = array<i64: 24, 8>}, {pipeline_mode = #tpu.pipeline_mode<synchronous>, transform_indices = @transform_3, window_bounds = array<i64: 8, 1>}, {transform_indices = @transform_4, window_bounds = array<i64: 1, 8, 32>}]} {
    %c0 = arith.constant 0 : index
    %c0_0 = arith.constant 0 : index
    %0 = vector.load %arg2[%c0, %c0_0] : memref<16x32xf32, #tpu.memory_space<vmem>>, vector<16x32xf32>
    %c0_1 = arith.constant 0 : index
    %c0_2 = arith.constant 0 : index
    %1 = vector.load %arg3[%c0_1, %c0_2] : memref<24x8xf32, #tpu.memory_space<vmem>>, vector<24x8xf32>
    %c0_3 = arith.constant 0 : index
    %c0_4 = arith.constant 0 : index
    %2 = vector.load %arg4[%c0_3, %c0_4] : memref<8x1xf32, #tpu.memory_space<vmem>>, vector<8x1xf32>
    %3 = vector.shape_cast %2 : vector<8x1xf32> to vector<8x1xf32>
    %4 = vector.broadcast %3 : vector<8x1xf32> to vector<8x32xf32>
    %5 = tpu.iota {dimensions = array<i32: 1>} : vector<8x32xi32>
    %c0_i32 = arith.constant 0 : i32
    %6 = vector.broadcast %c0_i32 : i32 to vector<8x32xi32>
    %7 = arith.cmpi ne, %5, %6 : vector<8x32xi32>
    %c31_i32 = arith.constant 31 : i32
    %8 = vector.broadcast %c31_i32 : i32 to vector<8x32xi32>
    %9 = arith.cmpi ne, %5, %8 : vector<8x32xi32>
    %c0_5 = arith.constant 0 : index
    %c0_6 = arith.constant 0 : index
    %c0_7 = arith.constant 0 : index
    %10 = vector.load %arg1[%c0_5, %c0_6, %c0_7] : memref<1x8x16xf32, #tpu.memory_space<vmem>>, vector<1x8x16xf32>
    %11 = vector.shape_cast %10 : vector<1x8x16xf32> to vector<8x16xf32>
    %cst = arith.constant dense<0.000000e+00> : vector<8x32xf32>
    %12 = tpu.matmul %11, %0, %cst {dimension_numbers = #tpu.dot_dimension_numbers<[1], [0], [0], [1], [0, 0, 1, 1], [], []>} : vector<8x16xf32>, vector<16x32xf32>, vector<8x32xf32> -> vector<8x32xf32>
    %13 = vector.shape_cast %12 : vector<8x32xf32> to vector<1x8x32xf32>
    %c0_8 = arith.constant 0 : index
    %c0_9 = arith.constant 0 : index
    %c0_10 = arith.constant 0 : index
    %14 = vector.load %arg6[%c0_8, %c0_9, %c0_10] : memref<1x8x32xf32, #tpu.memory_space<vmem>>, vector<1x8x32xf32>
    tpu.vector_store %arg6[%c0_8, %c0_9, %c0_10], %13 {strides = array<i32>} : memref<1x8x32xf32, #tpu.memory_space<vmem>>, vector<1x8x32xf32>,
    %c0_i32_11 = arith.constant 0 : i32
    %15 = arith.index_cast %c0_i32_11 : i32 to index
    %c0_12 = arith.constant 0 : index
    %c0_13 = arith.constant 0 : index
    %16 = vector.load %arg6[%15, %c0_12, %c0_13] : memref<1x8x32xf32, #tpu.memory_space<vmem>>, vector<1x8x32xf32>
    %17 = vector.shape_cast %16 : vector<1x8x32xf32> to vector<8x32xf32>
    %cst_14 = arith.constant dense<0.000000e+00> : vector<24x32xf32>
    %18 = tpu.matmul %1, %17, %cst_14 {dimension_numbers = #tpu.dot_dimension_numbers<[1], [0], [0], [1], [0, 0, 1, 1], [], []>} : vector<24x8xf32>, vector<8x32xf32>, vector<24x32xf32> -> vector<24x32xf32>
    %19 = vector.extract_strided_slice %18 {offsets = [0, 0], sizes = [8, 32], strides = [1, 1]} : vector<24x32xf32> to vector<8x32xf32>
    %20 = vector.extract_strided_slice %18 {offsets = [8, 0], sizes = [8, 32], strides = [1, 1]} : vector<24x32xf32> to vector<8x32xf32>
    %21 = vector.extract_strided_slice %18 {offsets = [16, 0], sizes = [8, 32], strides = [1, 1]} : vector<24x32xf32> to vector<8x32xf32>
    %c1_i32 = arith.constant 1 : i32
    %22 = tpu.dynamic_rotate %19 by %c1_i32 dim 1 : vector<8x32xf32>, i32 -> vector<8x32xf32>
    %cst_15 = arith.constant 0.000000e+00 : f32
    %23 = vector.broadcast %cst_15 : f32 to vector<8x32xf32>
    %24 = arith.select %7, %22, %23 : vector<8x32xi1>, vector<8x32xf32>
    %c31_i32_16 = arith.constant 31 : i32
    %25 = tpu.dynamic_rotate %21 by %c31_i32_16 dim 1 : vector<8x32xf32>, i32 -> vector<8x32xf32>
    %cst_17 = arith.constant 0.000000e+00 : f32
    %26 = vector.broadcast %cst_17 : f32 to vector<8x32xf32>
    %27 = arith.select %9, %25, %26 : vector<8x32xi1>, vector<8x32xf32>
    %28 = arith.addf %24, %20 : vector<8x32xf32>
    %29 = arith.addf %28, %27 : vector<8x32xf32>
    %30 = arith.addf %29, %4 : vector<8x32xf32>
    %31 = arith.index_cast %c0_i32_11 : i32 to index
    %c0_18 = arith.constant 0 : index
    %c0_19 = arith.constant 0 : index
    %32 = vector.load %arg5[%31, %c0_18, %c0_19] : memref<1x8x32xf32, #tpu.memory_space<vmem>>, vector<1x8x32xf32>
    %33 = vector.shape_cast %32 : vector<1x8x32xf32> to vector<8x32xf32>
    %34 = vector.shape_cast %30 : vector<8x32xf32> to vector<1x8x32xf32>
    tpu.vector_store %arg5[%31, %c0_18, %c0_19], %34 {strides = array<i32>} : memref<1x8x32xf32, #tpu.memory_space<vmem>>, vector<1x8x32xf32>,
    %c1_i32_20 = arith.constant 1 : i32
    return
  }
  func.func @transform_0(%arg0: i32) -> (i32, i32, i32) {
    %c0_i32 = arith.constant 0 : i32
    %c0_i32_0 = arith.constant 0 : i32
    %c0_i32_1 = arith.constant 0 : i32
    return %arg0, %c0_i32, %c0_i32_0 : i32, i32, i32
  }
  func.func @transform_1(%arg0: i32) -> (i32, i32) {
    %c0_i32 = arith.constant 0 : i32
    %c0_i32_0 = arith.constant 0 : i32
    %c0_i32_1 = arith.constant 0 : i32
    return %c0_i32, %c0_i32_0 : i32, i32
  }
  func.func @transform_2(%arg0: i32) -> (i32, i32) {
    %c0_i32 = arith.constant 0 : i32
    %c0_i32_0 = arith.constant 0 : i32
    %c0_i32_1 = arith.constant 0 : i32
    return %c0_i32, %c0_i32_0 : i32, i32
  }
  func.func @transform_3(%arg0: i32) -> (i32, i32) {
    %c0_i32 = arith.constant 0 : i32
    %c0_i32_0 = arith.constant 0 : i32
    %c0_i32_1 = arith.constant 0 : i32
    return %c0_i32, %c0_i32_0 : i32, i32
  }
  func.func @transform_4(%arg0: i32) -> (i32, i32, i32) {
    %c0_i32 = arith.constant 0 : i32
    %c0_i32_0 = arith.constant 0 : i32
    %c0_i32_1 = arith.constant 0 : i32
    return %arg0, %c0_i32, %c0_i32_0 : i32, i32, i32
  }
}

</mosaic_0001>

<llo_original>
// kernel: tpu_custom_call.1
$region0: #{tpu_custom_call.1}
  #allocation0 [shape = 'u32[]', space=smem, size = 0x4, offset = 0x4, fixed_abs, tag = 'smem constant byte address 0x4 - core index']
  #allocation1 [shape = 'u32[72,128]{1,0:T(1,128)}', space=vmem, size = 0x9000, scoped, tag = 'internal scratch']
  #allocation2 [shape = 'f32[1,8,32]{2,1,0:T(8,128)}', space=vmem, size = 0x1000, scoped, tag = 'scratch operand']
  %s0 = inlined_call_operand.vmem [shape: f32[2,8,16], index: 0, kind: input, shape index: {}]
  %s1 = inlined_call_operand.vmem [shape: f32[16,32], index: 1, kind: input, shape index: {}]
  %s2 = inlined_call_operand.vmem [shape: f32[24,8], index: 2, kind: input, shape index: {}]
  %s3 = inlined_call_operand.vmem [shape: f32[8,1], index: 3, kind: input, shape index: {}]
  %s4 = inlined_call_operand.hbm [shape: f32[2,8,32], index: 4, kind: output, shape index: {}]
  %s5 = sld [smem:[#allocation0]]
  $region49: #{tpu_custom_call.1} parent=0
    _
  %s7 = ssub.s32 1, %s5
  %s8 = scalar_select 0, %s7, %s5
  $region1: #{tpu_custom_call.1} parent=0
    #allocation3 [shape = 'u8[8192]{0}', space=vmem, size = 0x2000, scoped, tag = 'output window, operand 0']
    #allocation4 [shape = 's32[2]{0}', space=sflag, size = 0x8, scoped, tag = 'scoped memory for tpu_custom_call.1']
    %9 = vsyncpa [#allocation4], 0
    %s10 = scalar_lea.sflag [#allocation4], 1
    %11 = vsyncpa %s10, 0
    loop: start=0, step=1, limit=4
    $region2: #{tpu_custom_call.1} parent=1 // loop_pre_header
      _
    $region3: #{tpu_custom_call.1} parent=1 // loop_header
      %s13 = sphi 0, %s17
      %p14 = scmp.ge.s32.totalorder %s13, 4
      %s23 = sphi 0, %s25
      %s26 = sphi 0, %s23
      %s27 = sphi 0, %s26
      %s43 = sphi 0, %s27
      %s47 = sphi 0, %s47
      %s49 = sphi 0, %s47
      %s50 = sphi 0, %s49
      %s64 = sphi 0, %s50
      %s68 = sphi 0, %s68
      %s70 = sphi 0, %s68
      %s71 = sphi 0, %s70
      %s85 = sphi 0, %s71
      %s89 = sphi 0, %s89
      %s91 = sphi 0, %s89
      %s92 = sphi 0, %s91
      %s106 = sphi 0, %s92
      %s112 = sphi 0, %s114
      %s115 = sphi 0, %s112
      %s116 = sphi 0, %s115
      %s132 = sphi 0, %s116
    $region4: #{tpu_custom_call.1} parent=1 // loop_header_branch
      %16 = sbr.rel (%p14) target = $region8
    $region5: #{tpu_custom_call.1} parent=1 // loop_body
      %s18 = ssub.s32 %s13, 1
      %s19 = ssub.s32 %s13, 2
      %s20 = sadd.s32 %s13, 1
      %s21 = ssub.s32 %s13, %s20
      %p22 = scmp.eq.s32.totalorder %s21, 0
      %s24 = sadd.s32 %s23, 1
      %s25 = scalar_select %p22, %s23, %s24
      %p28 = pneg %p22
      %p29 = scmp.eq.s32.totalorder %s13, 1
      %p30 = por %p28, %p29
      %p31 = scmp.ne.s32.totalorder %s23, %s26
      %p32 = scmp.eq.s32.totalorder %s13, 0
      %p33 = por %p31, %p32
      %p34 = scmp.ne.s32.totalorder %s23, %s26
      %p35 = scmp.eq.s32.totalorder %s18, 1
      %p36 = por %p34, %p35
      %p37 = scmp.ne.s32.totalorder %s26, %s27
      %p38 = scmp.eq.s32.totalorder %s18, 0
      %p39 = por %p37, %p38
      %p40 = scmp.ne.s32.totalorder %s26, %s27
      %p41 = scmp.eq.s32.totalorder %s19, 1
      %p42 = por %p40, %p41
      %p44 = scmp.ne.s32.totalorder %s27, %s43
      %p45 = scmp.eq.s32.totalorder %s19, 0
      %p46 = por %p44, %p45
      %s48 = sadd.s32 %s47, 1
      %p51 = scmp.eq.s32.totalorder %s13, 1
      %p52 = scmp.ne.s32.totalorder %s47, %s49
      %p53 = scmp.eq.s32.totalorder %s13, 0
      %p54 = por %p52, %p53
      %p55 = scmp.ne.s32.totalorder %s47, %s49
      %p56 = scmp.eq.s32.totalorder %s18, 1
      %p57 = por %p55, %p56
      %p58 = scmp.ne.s32.totalorder %s49, %s50
      %p59 = scmp.eq.s32.totalorder %s18, 0
      %p60 = por %p58, %p59
      %p61 = scmp.ne.s32.totalorder %s49, %s50
      %p62 = scmp.eq.s32.totalorder %s19, 1
      %p63 = por %p61, %p62
      %p65 = scmp.ne.s32.totalorder %s50, %s64
      %p66 = scmp.eq.s32.totalorder %s19, 0
      %p67 = por %p65, %p66
      %s69 = sadd.s32 %s68, 1
      %p72 = scmp.eq.s32.totalorder %s13, 1
      %p73 = scmp.ne.s32.totalorder %s68, %s70
      %p74 = scmp.eq.s32.totalorder %s13, 0
      %p75 = por %p73, %p74
      %p76 = scmp.ne.s32.totalorder %s68, %s70
      %p77 = scmp.eq.s32.totalorder %s18, 1
      %p78 = por %p76, %p77
      %p79 = scmp.ne.s32.totalorder %s70, %s71
      %p80 = scmp.eq.s32.totalorder %s18, 0
      %p81 = por %p79, %p80
      %p82 = scmp.ne.s32.totalorder %s70, %s71
      %p83 = scmp.eq.s32.totalorder %s19, 1
      %p84 = por %p82, %p83
      %p86 = scmp.ne.s32.totalorder %s71, %s85
      %p87 = scmp.eq.s32.totalorder %s19, 0
      %p88 = por %p86, %p87
      %s90 = sadd.s32 %s89, 1
      %p93 = scmp.eq.s32.totalorder %s13, 1
      %p94 = scmp.ne.s32.totalorder %s89, %s91
      %p95 = scmp.eq.s32.totalorder %s13, 0
      %p96 = por %p94, %p95
      %p97 = scmp.ne.s32.totalorder %s89, %s91
      %p98 = scmp.eq.s32.totalorder %s18, 1
      %p99 = por %p97, %p98
      %p100 = scmp.ne.s32.totalorder %s91, %s92
      %p101 = scmp.eq.s32.totalorder %s18, 0
      %p102 = por %p100, %p101
      %p103 = scmp.ne.s32.totalorder %s91, %s92
      %p104 = scmp.eq.s32.totalorder %s19, 1
      %p105 = por %p103, %p104
      %p107 = scmp.ne.s32.totalorder %s92, %s106
      %p108 = scmp.eq.s32.totalorder %s19, 0
      %p109 = por %p107, %p108
      %s110 = ssub.s32 %s13, %s20
      %p111 = scmp.eq.s32.totalorder %s110, 0
      %s113 = sadd.s32 %s112, 1
      %s114 = scalar_select %p111, %s112, %s113
      %p117 = pneg %p111
      %p118 = scmp.eq.s32.totalorder %s13, 1
      %p119 = por %p117, %p118
      %p120 = scmp.ne.s32.totalorder %s112, %s115
      %p121 = scmp.eq.s32.totalorder %s13, 0
      %p122 = por %p120, %p121
      %p123 = scmp.ne.s32.totalorder %s112, %s115
      %p124 = scmp.eq.s32.totalorder %s18, 1
      %p125 = por %p123, %p124
      %p126 = scmp.ne.s32.totalorder %s115, %s116
      %p127 = scmp.eq.s32.totalorder %s18, 0
      %p128 = por %p126, %p127
      %p129 = scmp.ne.s32.totalorder %s115, %s116
      %p130 = scmp.eq.s32.totalorder %s19, 1
      %p131 = por %p129, %p130
      %p133 = scmp.ne.s32.totalorder %s116, %s132
      %p134 = scmp.eq.s32.totalorder %s19, 0
      %p135 = por %p133, %p134
      %p136 = scmp.le.s32.totalorder 1, %s13
      %p137 = scmp.lt.s32.totalorder %s13, 3
      %p138 = pnand %p136, %p137
      %p139 = pneg %p138
      // Predicated region
      $region9: #{tpu_custom_call.1} parent=5 // pred_check
        _
      $region10: #{tpu_custom_call.1} parent=5 // pred_check_branch
        %141 = sbr.rel (%p138) target = $region12
      $region11: #{tpu_custom_call.1} parent=5 // pred_region
        %s142 = ssub.s32 %s13, 1
        // Predicated region
        $region13: #{tpu_custom_call.1} parent=11 // pred_check
          %p143 = pneg %p60
        $region14: #{tpu_custom_call.1} parent=11 // pred_check_branch
          %145 = sbr.rel (%p143) target = $region16
        $region15: #{tpu_custom_call.1} parent=11 // pred_region
          _
        $region16: #{tpu_custom_call.1} parent=11 // pred_fallthru
          _
        // Predicated region
        $region17: #{tpu_custom_call.1} parent=11 // pred_check
          %p146 = pneg %p81
        $region18: #{tpu_custom_call.1} parent=11 // pred_check_branch
          %148 = sbr.rel (%p146) target = $region20
        $region19: #{tpu_custom_call.1} parent=11 // pred_region
          _
        $region20: #{tpu_custom_call.1} parent=11 // pred_fallthru
          _
        // Predicated region
        $region21: #{tpu_custom_call.1} parent=11 // pred_check
          %p149 = pneg %p102
        $region22: #{tpu_custom_call.1} parent=11 // pred_check_branch
          %151 = sbr.rel (%p149) target = $region24
        $region23: #{tpu_custom_call.1} parent=11 // pred_region
          _
        $region24: #{tpu_custom_call.1} parent=11 // pred_fallthru
          _
      $region12: #{tpu_custom_call.1} parent=5 // pred_fallthru
        _
      %p152 = scmp.lt.s32.totalorder %s13, 2
      // Predicated region
      $region25: #{tpu_custom_call.1} parent=5 // pred_check
        %p153 = pneg %p152
      $region26: #{tpu_custom_call.1} parent=5 // pred_check_branch
        %155 = sbr.rel (%p153) target = $region28
      $region27: #{tpu_custom_call.1} parent=5 // pred_region
        // Predicated region
        $region29: #{tpu_custom_call.1} parent=27 // pred_check
          %p156 = pneg %p33
        $region30: #{tpu_custom_call.1} parent=27 // pred_check_branch
          %158 = sbr.rel (%p156) target = $region32
        $region31: #{tpu_custom_call.1} parent=27 // pred_region
          %p159 = scmp.lt.s32.totalorder %s13, 1
          %s160 = scalar_select %p159, %s13, 1
          %s161 = smul.addr %s160, 8
          %s162 = scalar_lea.vmem %s0, %s161
        $region32: #{tpu_custom_call.1} parent=27 // pred_fallthru
          _
      $region28: #{tpu_custom_call.1} parent=5 // pred_fallthru
        _
      %p163 = scmp.le.s32.totalorder 1, %s13
      %p164 = scmp.lt.s32.totalorder %s13, 3
      %p165 = pnand %p163, %p164
      %p166 = pneg %p165
      // Predicated region
      $region33: #{tpu_custom_call.1} parent=5 // pred_check
        _
      $region34: #{tpu_custom_call.1} parent=5 // pred_check_branch
        %168 = sbr.rel (%p165) target = $region36
      $region35: #{tpu_custom_call.1} parent=5 // pred_region
        %s169 = ssub.s32 %s13, 1
        %p170 = scmp.lt.s32.totalorder %s18, 1
        %s171 = scalar_select %p170, %s18, 1
        %s172 = smul.addr %s171, 8
        %s173 = scalar_lea.vmem %s0, %s172
        %p174 = pneg %p39
        %p175 = pneg %p36
        %p176 = pneg %p60
        %p177 = pneg %p57
        %p178 = pneg %p81
        %p179 = pneg %p78
        %p180 = pneg %p102
        %p181 = pneg %p99
        %p182 = pneg %p128
        %p183 = pneg %p125
        %s184 = sand.u32 %s115, 1
        %s185 = scalar_lea.sflag [#allocation4], %s184
        %s186 = sand.u32 %s115, 1
        %s187 = smul.addr %s186, 8
        %s188 = scalar_lea.vmem [#allocation3], %s187
        %p189 = scmp.lt.s32.totalorder %s18, 1
        %s190 = scalar_select %p189, %s18, 1
        %s191 = smul.addr %s190, 8
        %s192 = scalar_lea.vmem %s0, %s191
        %v193 = vld [vmem:[%s1] sm:$0xff]
        %v194 = vld [vmem:[%s1 + $0x8] sm:$0xff]
        %v195 = vld [vmem:[%s2] sm:$0xff]
        %v196 = vld [vmem:[%s2 + $0x8] sm:$0xff]
        %v197 = vld [vmem:[%s2 + $0x10] sm:$0xff]
        %v198 = vld [vmem:[%s3] sm:$0xff]
        %200 = vset.pattern.permute.xlu0 0
        %201 = vperm.xlu0 %200, %v198
        %v202 = vpop.permute.xlu0 %201
        %v204 = vlaneseq
        %v205 = vand.u32 %v204, 127
        %vm206 = vcmp.ne.s32.totalorder %v205, 0
        %vm207 = vcmp.ne.s32.totalorder %v205, 31
        %v208 = vld [vmem:[%s192] sm:$0xff]
        %vm209 = vcmask 130048
        %v211 = vsel %vm209, %v208, 0
        %213 = vmatpush.msra.mxu0 0.0
        %214 = vmatpush.msra.mxu0 0.0
        %215 = vmatpush.msra.mxu0 0.0
        %216 = vmatpush.msra.mxu0 0.0
        %217 = vmatpush.msra.mxu0 0.0
        %218 = vmatpush.msra.mxu0 0.0
        %219 = vmatpush.msra.mxu0 0.0
        %220 = vmatpush.msra.mxu0 0.0
        %221 = vmatpush.msra.mxu0 0.0
        %222 = vmatpush.msra.mxu0 0.0
        %223 = vmatpush.msra.mxu0 0.0
        %224 = vmatpush.msra.mxu0 0.0
        %225 = vmatpush.msra.mxu0 0.0
        %226 = vmatpush.msra.mxu0 0.0
        %227 = vmatpush.msra.mxu0 %v194
        %228 = vmatpush.msra.mxu0 %v193
        %229 = vmatmul.f32.gmra.mxu0 %v211
        %v230 = vpop.f32.mrf.mxu0
        %v231 = vadd.f32 0.0, %v230
        %232 = vdwg.mxu0
        %vm233 = vcmask 261120
        %234 = vst.msk [vmem:[#allocation2] sm:$0xff] %vm233, %v231
        %v235 = vld [vmem:[#allocation2] sm:$0xff]
        %vm236 = vcmask 64512
        %v238 = vsel %vm236, %v195, 0
        %v241 = vsel %vm236, %v196, 0
        %v244 = vsel %vm236, %v197, 0
        %246 = vmatpush.msra.mxu0 0.0
        %247 = vmatpush.msra.mxu0 0.0
        %248 = vmatpush.msra.mxu0 0.0
        %249 = vmatpush.msra.mxu0 0.0
        %250 = vmatpush.msra.mxu0 0.0
        %251 = vmatpush.msra.mxu0 0.0
        %252 = vmatpush.msra.mxu0 0.0
        %253 = vmatpush.msra.mxu0 0.0
        %254 = vmatpush.msra.mxu0 0.0
        %255 = vmatpush.msra.mxu0 0.0
        %256 = vmatpush.msra.mxu0 0.0
        %257 = vmatpush.msra.mxu0 0.0
        %258 = vmatpush.msra.mxu0 0.0
        %259 = vmatpush.msra.mxu0 0.0
        %260 = vmatpush.msra.mxu0 0.0
        %261 = vmatpush.msra.mxu0 %v235
        %262 = vmatmul.f32.gmra.mxu0 %v238
        %v263 = vpop.f32.mrf.mxu0
        %v264 = vadd.f32 0.0, %v263
        %265 = vmatmul.f32.gmra.mxu0 %v241
        %v266 = vpop.f32.mrf.mxu0
        %v267 = vadd.f32 0.0, %v266
        %268 = vmatmul.f32.gmra.mxu0 %v244
        %v269 = vpop.f32.mrf.mxu0
        %v270 = vadd.f32 0.0, %v269
        %271 = vdwg.mxu0
        %vm272 = vcmask 1047808
        %273 = vrot.lane.b32.xlu0 %v264, 32
        %v274 = vpop.permute.xlu0 %273
        %v275 = vsel %vm272, %v274, %v264
        %276 = vrot.lane.b32.xlu0 %v275, 32
        %v277 = vpop.permute.xlu0 %276
        %v278 = vsel %vm272, %v277, %v264
        %280 = vrot.lane.b32.xlu0 %v278, 97
        %v281 = vpop.permute.xlu0 %280
        %v283 = vsel %vm206, %v281, 0.0
        %284 = vrot.lane.b32.xlu0 %v270, 32
        %v285 = vpop.permute.xlu0 %284
        %v286 = vsel %vm272, %v285, %v270
        %287 = vrot.lane.b32.xlu0 %v286, 32
        %v288 = vpop.permute.xlu0 %287
        %v289 = vsel %vm272, %v288, %v270
        %291 = vrot.lane.b32.xlu0 %v289, 127
        %v292 = vpop.permute.xlu0 %291
        %v294 = vsel %vm207, %v292, 0.0
        %v295 = vadd.f32 %v283, %v267
        %v296 = vadd.f32 %v295, %v294
        %v297 = vadd.f32 %v296, %v202
        %298 = vst.msk [vmem:[%s188] sm:$0xff] %vm233, %v297
        %s299 = sand.u32 %s115, 1
        %s300 = scalar_lea.sflag [#allocation4], %s299
        %s301 = sand.u32 %s115, 1
        %s302 = smul.addr %s301, 8
        %s303 = scalar_lea.vmem [#allocation3], %s302
        // Predicated region
        $region37: #{tpu_custom_call.1} parent=35 // pred_check
          %p304 = pneg %p125
        $region38: #{tpu_custom_call.1} parent=35 // pred_check_branch
          %306 = sbr.rel (%p304) target = $region40
        $region39: #{tpu_custom_call.1} parent=35 // pred_region
          %308 = vsyncadd %s300, 0
          %s309 = smul.addr %s18, 8
          %s310 = scalar_lea.hbm %s4, %s309
          %s312 = sshll.u32 %s303, 4
          %s313 = int_to_ptr.vmem [resolvable:$true] %s312
          %s314 = sshll.u32 %s310, 4
          %s315 = int_to_ptr.hbm [resolvable:$true] %s314
          %317 = dma.vmem_to_hbm [thread:$0]  %s313, 128, %s315, %s300
        $region40: #{tpu_custom_call.1} parent=35 // pred_fallthru
          _
      $region36: #{tpu_custom_call.1} parent=5 // pred_fallthru
        _
      %p318 = scmp.le.s32.totalorder 2, %s13
      // Predicated region
      $region41: #{tpu_custom_call.1} parent=5 // pred_check
        %p319 = pneg %p318
      $region42: #{tpu_custom_call.1} parent=5 // pred_check_branch
        %321 = sbr.rel (%p319) target = $region44
      $region43: #{tpu_custom_call.1} parent=5 // pred_region
        %s322 = ssub.s32 %s13, 2
        // Predicated region
        $region45: #{tpu_custom_call.1} parent=43 // pred_check
          %p323 = pneg %p131
        $region46: #{tpu_custom_call.1} parent=43 // pred_check_branch
          %325 = sbr.rel (%p323) target = $region48
        $region47: #{tpu_custom_call.1} parent=43 // pred_region
          %s326 = sand.u32 %s116, 1
          %s327 = scalar_lea.sflag [#allocation4], %s326
          %s328 = sand.u32 %s116, 1
          %s329 = smul.addr %s328, 8
          %s330 = scalar_lea.vmem [#allocation3], %s329
          %332 = dma.done %s327, 128
        $region48: #{tpu_custom_call.1} parent=43 // pred_fallthru
          _
      $region44: #{tpu_custom_call.1} parent=5 // pred_fallthru
        _
    $region6: #{tpu_custom_call.1} parent=1 // loop_footer
      %s17 = sadd.s32 1, %s13
    $region7: #{tpu_custom_call.1} parent=1 // loop_footer_branch
      %12 = sbr.rel target = $region3
    $region8: #{tpu_custom_call.1} parent=1 // loop_exit
      _
    %333 = vsyncpa [#allocation4], 1
    %s334 = scalar_lea.sflag [#allocation4], 1
    %335 = vsyncpa %s334, 1

</llo_original>
